<compile_context>
chip_gen: v7x
topology: tpu7x:2x2x1
jax: 0.10.0
libtpu: 0.0.40
codegen_flags: <defaults>
</compile_context>

<pallas_src>
import jax
import jax.numpy as jnp
from jax.experimental import pallas as pl
from jax.experimental.pallas import tpu as pltpu

INPUT_DIM = 285
HIDDEN1 = 200
HIDDEN2 = 50
HIDDEN3 = 20
OUTPUT_DIM = 2
NEG_SLOPE = 0.01  # torch.nn.LeakyReLU default


def _leaky_relu(h):
    # h is f32; predicate matches torch semantics (x >= 0 -> x, else slope*x).
    return jnp.where(h >= 0, h, NEG_SLOPE * h)


def _mlp_kernel(x_ref, w1_ref, b1_ref, w2_ref, b2_ref, w3_ref, b3_ref,
                w4_ref, b4_ref, o_ref):
    # Weights are (in, out) bf16; biases are (1, out) f32; x block is (TB, 285).
    x = x_ref[...].astype(jnp.bfloat16)

    h = _leaky_relu(
        jnp.dot(x, w1_ref[...], preferred_element_type=jnp.float32) + b1_ref[...])
    h = _leaky_relu(
        jnp.dot(h.astype(jnp.bfloat16), w2_ref[...],
                preferred_element_type=jnp.float32) + b2_ref[...])
    h = _leaky_relu(
        jnp.dot(h.astype(jnp.bfloat16), w3_ref[...],
                preferred_element_type=jnp.float32) + b3_ref[...])
    y = (jnp.dot(h.astype(jnp.bfloat16), w4_ref[...],
                 preferred_element_type=jnp.float32) + b4_ref[...])

    o_ref[...] = y.astype(o_ref.dtype)


def _pick_batch_tile(batch, cap=2048):
    """Batch tile: multiple of 8, capped at `cap`, aiming for >= 2 grid steps.

    Splitting into at least two steps keeps both v7x TensorCores busy (the grid
    batch axis is marked "parallel"); it is harmless on v5e/v6e. At TB=2048 the
    VMEM footprint (double-buffered f32 x tile + f32/bf16 intermediates +
    resident weights) is ~12 MiB, far below the 40 MiB limit we request.
    """
    if batch > 2 * cap:
        return cap
    half = (batch + 1) // 2
    return max(8, ((half + 7) // 8) * 8)


@jax.jit
def better_classifier_forward(x, params):
    """Forward pass matching the PyTorch better_classifier module.

    Args:
      x: (B, 285) float32
      params: dict with w1..w4 in PyTorch (out, in) layout and b1..b4 as (out,).
    Returns:
      (B, 2) float32 logits.
    """
    B, in_dim = x.shape
    assert in_dim == INPUT_DIM

    # One-time wrapper-side layout prep:
    #  - transpose weights to (in, out) so the kernel does plain (M,K)x(K,N) dots
    #  - cast weights to bf16 for the MXU (f32 accumulation kept in-kernel)
    #  - keep biases f32, shaped (1, out) for a TPU-friendly broadcast
    w1 = params["w1"].T.astype(jnp.bfloat16)   # (285, 200)
    w2 = params["w2"].T.astype(jnp.bfloat16)   # (200, 50)
    w3 = params["w3"].T.astype(jnp.bfloat16)   # (50, 20)
    w4 = params["w4"].T.astype(jnp.bfloat16)   # (20, 2)
    b1 = params["b1"].reshape(1, HIDDEN1).astype(jnp.float32)
    b2 = params["b2"].reshape(1, HIDDEN2).astype(jnp.float32)
    b3 = params["b3"].reshape(1, HIDDEN3).astype(jnp.float32)
    b4 = params["b4"].reshape(1, OUTPUT_DIM).astype(jnp.float32)

    tb = _pick_batch_tile(B)
    grid = (pl.cdiv(B, tb),)

    def x_map(i):
        return (i, 0)

    def const_map(i):
        return (0, 0)

    flops = 2 * B * (INPUT_DIM * HIDDEN1 + HIDDEN1 * HIDDEN2
                     + HIDDEN2 * HIDDEN3 + HIDDEN3 * OUTPUT_DIM)
    weight_bytes = 2 * (INPUT_DIM * HIDDEN1 + HIDDEN1 * HIDDEN2
                        + HIDDEN2 * HIDDEN3 + HIDDEN3 * OUTPUT_DIM)
    bias_bytes = 4 * (HIDDEN1 + HIDDEN2 + HIDDEN3 + OUTPUT_DIM)
    bytes_accessed = 4 * B * INPUT_DIM + 4 * B * OUTPUT_DIM + weight_bytes + bias_bytes
    cost = pl.CostEstimate(flops=flops, transcendentals=0,
                           bytes_accessed=bytes_accessed)

    return pl.pallas_call(
        _mlp_kernel,
        out_shape=jax.ShapeDtypeStruct((B, OUTPUT_DIM), x.dtype),
        grid=grid,
        in_specs=[
            pl.BlockSpec((tb, INPUT_DIM), x_map),            # x tile (streams)
            pl.BlockSpec((INPUT_DIM, HIDDEN1), const_map),   # w1 (resident)
            pl.BlockSpec((1, HIDDEN1), const_map),           # b1
            pl.BlockSpec((HIDDEN1, HIDDEN2), const_map),     # w2
            pl.BlockSpec((1, HIDDEN2), const_map),           # b2
            pl.BlockSpec((HIDDEN2, HIDDEN3), const_map),     # w3
            pl.BlockSpec((1, HIDDEN3), const_map),           # b3
            pl.BlockSpec((HIDDEN3, OUTPUT_DIM), const_map),  # w4
            pl.BlockSpec((1, OUTPUT_DIM), const_map),        # b4
        ],
        out_specs=pl.BlockSpec((tb, OUTPUT_DIM), x_map),
        compiler_params=pltpu.CompilerParams(
            dimension_semantics=("parallel",),
            vmem_limit_bytes=40 * 1024 * 1024,
        ),
        cost_estimate=cost,
    )(x, w1, b1, w2, b2, w3, b3, w4, b4)


def _init_linear(key, out_dim, in_dim):
    # Mirrors nn.Linear default: uniform(-1/sqrt(in), 1/sqrt(in)).
    k_w, k_b = jax.random.split(key)
    bound = 1.0 / jnp.sqrt(jnp.float32(in_dim))
    w = jax.random.uniform(k_w, (out_dim, in_dim), jnp.float32, -bound, bound)
    b = jax.random.uniform(k_b, (out_dim,), jnp.float32, -bound, bound)
    return w, b


def init_params(key):
    k1, k2, k3, k4 = jax.random.split(key, 4)
    w1, b1 = _init_linear(k1, HIDDEN1, INPUT_DIM)
    w2, b2 = _init_linear(k2, HIDDEN2, HIDDEN1)
    w3, b3 = _init_linear(k3, HIDDEN3, HIDDEN2)
    w4, b4 = _init_linear(k4, OUTPUT_DIM, HIDDEN3)
    return dict(w1=w1, b1=b1, w2=w2, b2=b2, w3=w3, b3=b3, w4=w4, b4=b4)


def _reference_forward(x, p):
    def lrelu(h):
        return jnp.where(h >= 0, h, NEG_SLOPE * h)
    h = lrelu(x @ p["w1"].T + p["b1"])
    h = lrelu(h @ p["w2"].T + p["b2"])
    h = lrelu(h @ p["w3"].T + p["b3"])
    return h @ p["w4"].T + p["b4"]


if __name__ == "__main__":
    key = jax.random.PRNGKey(0)
    k_x, k_p = jax.random.split(key)

    B = 8
    x = jax.random.normal(k_x, (B, INPUT_DIM), jnp.float32)
    params = init_params(k_p)

    y = better_classifier_forward(x, params)
    y = jax.block_until_ready(y)

    y_ref = _reference_forward(x, params)
    assert y.shape == (B, OUTPUT_DIM)
    # Tolerance loosened vs. the pure-f32 version because the kernel now uses
    # the bf16 MXU path (f32 accumulation).
    assert jnp.allclose(y, y_ref, atol=5e-2, rtol=5e-2), (
        float(jnp.max(jnp.abs(y - y_ref)))
    )

    print("KERNEL_OK")
</pallas_src>

<mosaic_0001>
module attributes {stable_mosaic.version = 11 : i64} {
  func.func @_mlp_kernel(%arg0: i32, %arg1: memref<8x285xf32, #tpu.memory_space<vmem>>, %arg2: memref<285x200xbf16, #tpu.memory_space<vmem>>, %arg3: memref<1x200xf32, #tpu.memory_space<vmem>>, %arg4: memref<200x50xbf16, #tpu.memory_space<vmem>>, %arg5: memref<1x50xf32, #tpu.memory_space<vmem>>, %arg6: memref<50x20xbf16, #tpu.memory_space<vmem>>, %arg7: memref<1x20xf32, #tpu.memory_space<vmem>>, %arg8: memref<20x2xbf16, #tpu.memory_space<vmem>>, %arg9: memref<1x2xf32, #tpu.memory_space<vmem>>, %arg10: memref<8x2xf32, #tpu.memory_space<vmem>>) attributes {dimension_semantics = [#tpu.dimension_semantics<parallel>], iteration_bounds = array<i64: 1>, scalar_prefetch = 0 : i64, scratch_operands = 0 : i64, tpu.core_type = #tpu.core_type<tc>, window_params = [{transform_indices = @transform_0, window_bounds = array<i64: 8, 285>}, {pipeline_mode = #tpu.pipeline_mode<synchronous>, transform_indices = @transform_1, window_bounds = array<i64: 285, 200>}, {pipeline_mode = #tpu.pipeline_mode<synchronous>, transform_indices = @transform_2, window_bounds = array<i64: 1, 200>}, {pipeline_mode = #tpu.pipeline_mode<synchronous>, transform_indices = @transform_3, window_bounds = array<i64: 200, 50>}, {pipeline_mode = #tpu.pipeline_mode<synchronous>, transform_indices = @transform_4, window_bounds = array<i64: 1, 50>}, {pipeline_mode = #tpu.pipeline_mode<synchronous>, transform_indices = @transform_5, window_bounds = array<i64: 50, 20>}, {pipeline_mode = #tpu.pipeline_mode<synchronous>, transform_indices = @transform_6, window_bounds = array<i64: 1, 20>}, {pipeline_mode = #tpu.pipeline_mode<synchronous>, transform_indices = @transform_7, window_bounds = array<i64: 20, 2>}, {pipeline_mode = #tpu.pipeline_mode<synchronous>, transform_indices = @transform_8, window_bounds = array<i64: 1, 2>}, {transform_indices = @transform_9, window_bounds = array<i64: 8, 2>}]} {
    %c0 = arith.constant 0 : index
    %c0_0 = arith.constant 0 : index
    %0 = vector.load %arg1[%c0, %c0_0] : memref<8x285xf32, #tpu.memory_space<vmem>>, vector<8x285xf32>
    %1 = arith.truncf %0 : vector<8x285xf32> to vector<8x285xbf16>
    %c0_1 = arith.constant 0 : index
    %c0_2 = arith.constant 0 : index
    %2 = vector.load %arg2[%c0_1, %c0_2] : memref<285x200xbf16, #tpu.memory_space<vmem>>, vector<285x200xbf16>
    %cst = arith.constant dense<0.000000e+00> : vector<8x200xf32>
    %3 = tpu.matmul %1, %2, %cst {dimension_numbers = #tpu.dot_dimension_numbers<[1], [0], [0], [1], [0, 0, 1, 1], [], []>} : vector<8x285xbf16>, vector<285x200xbf16>, vector<8x200xf32> -> vector<8x200xf32>
    %c0_3 = arith.constant 0 : index
    %c0_4 = arith.constant 0 : index
    %4 = vector.load %arg3[%c0_3, %c0_4] : memref<1x200xf32, #tpu.memory_space<vmem>>, vector<1x200xf32>
    %5 = vector.broadcast %4 : vector<1x200xf32> to vector<8x200xf32>
    %6 = arith.addf %3, %5 : vector<8x200xf32>
    %cst_5 = arith.constant 0.000000e+00 : f32
    %7 = vector.broadcast %cst_5 : f32 to vector<8x200xf32>
    %8 = arith.cmpf oge, %6, %7 : vector<8x200xf32>
    %cst_6 = arith.constant 0.00999999977 : f32
    %9 = vector.broadcast %cst_6 : f32 to vector<8x200xf32>
    %10 = arith.mulf %9, %6 : vector<8x200xf32>
    %11 = arith.select %8, %6, %10 : vector<8x200xi1>, vector<8x200xf32>
    %12 = arith.truncf %11 : vector<8x200xf32> to vector<8x200xbf16>
    %c0_7 = arith.constant 0 : index
    %c0_8 = arith.constant 0 : index
    %13 = vector.load %arg4[%c0_7, %c0_8] : memref<200x50xbf16, #tpu.memory_space<vmem>>, vector<200x50xbf16>
    %cst_9 = arith.constant dense<0.000000e+00> : vector<8x50xf32>
    %14 = tpu.matmul %12, %13, %cst_9 {dimension_numbers = #tpu.dot_dimension_numbers<[1], [0], [0], [1], [0, 0, 1, 1], [], []>} : vector<8x200xbf16>, vector<200x50xbf16>, vector<8x50xf32> -> vector<8x50xf32>
    %c0_10 = arith.constant 0 : index
    %c0_11 = arith.constant 0 : index
    %15 = vector.load %arg5[%c0_10, %c0_11] : memref<1x50xf32, #tpu.memory_space<vmem>>, vector<1x50xf32>
    %16 = vector.broadcast %15 : vector<1x50xf32> to vector<8x50xf32>
    %17 = arith.addf %14, %16 : vector<8x50xf32>
    %cst_12 = arith.constant 0.000000e+00 : f32
    %18 = vector.broadcast %cst_12 : f32 to vector<8x50xf32>
    %19 = arith.cmpf oge, %17, %18 : vector<8x50xf32>
    %cst_13 = arith.constant 0.00999999977 : f32
    %20 = vector.broadcast %cst_13 : f32 to vector<8x50xf32>
    %21 = arith.mulf %20, %17 : vector<8x50xf32>
    %22 = arith.select %19, %17, %21 : vector<8x50xi1>, vector<8x50xf32>
    %23 = arith.truncf %22 : vector<8x50xf32> to vector<8x50xbf16>
    %c0_14 = arith.constant 0 : index
    %c0_15 = arith.constant 0 : index
    %24 = vector.load %arg6[%c0_14, %c0_15] : memref<50x20xbf16, #tpu.memory_space<vmem>>, vector<50x20xbf16>
    %cst_16 = arith.constant dense<0.000000e+00> : vector<8x20xf32>
    %25 = tpu.matmul %23, %24, %cst_16 {dimension_numbers = #tpu.dot_dimension_numbers<[1], [0], [0], [1], [0, 0, 1, 1], [], []>} : vector<8x50xbf16>, vector<50x20xbf16>, vector<8x20xf32> -> vector<8x20xf32>
    %c0_17 = arith.constant 0 : index
    %c0_18 = arith.constant 0 : index
    %26 = vector.load %arg7[%c0_17, %c0_18] : memref<1x20xf32, #tpu.memory_space<vmem>>, vector<1x20xf32>
    %27 = vector.broadcast %26 : vector<1x20xf32> to vector<8x20xf32>
    %28 = arith.addf %25, %27 : vector<8x20xf32>
    %cst_19 = arith.constant 0.000000e+00 : f32
    %29 = vector.broadcast %cst_19 : f32 to vector<8x20xf32>
    %30 = arith.cmpf oge, %28, %29 : vector<8x20xf32>
    %cst_20 = arith.constant 0.00999999977 : f32
    %31 = vector.broadcast %cst_20 : f32 to vector<8x20xf32>
    %32 = arith.mulf %31, %28 : vector<8x20xf32>
    %33 = arith.select %30, %28, %32 : vector<8x20xi1>, vector<8x20xf32>
    %34 = arith.truncf %33 : vector<8x20xf32> to vector<8x20xbf16>
    %c0_21 = arith.constant 0 : index
    %c0_22 = arith.constant 0 : index
    %35 = vector.load %arg8[%c0_21, %c0_22] : memref<20x2xbf16, #tpu.memory_space<vmem>>, vector<20x2xbf16>
    %cst_23 = arith.constant dense<0.000000e+00> : vector<8x2xf32>
    %36 = tpu.matmul %34, %35, %cst_23 {dimension_numbers = #tpu.dot_dimension_numbers<[1], [0], [0], [1], [0, 0, 1, 1], [], []>} : vector<8x20xbf16>, vector<20x2xbf16>, vector<8x2xf32> -> vector<8x2xf32>
    %c0_24 = arith.constant 0 : index
    %c0_25 = arith.constant 0 : index
    %37 = vector.load %arg9[%c0_24, %c0_25] : memref<1x2xf32, #tpu.memory_space<vmem>>, vector<1x2xf32>
    %38 = vector.broadcast %37 : vector<1x2xf32> to vector<8x2xf32>
    %39 = arith.addf %36, %38 : vector<8x2xf32>
    %c0_26 = arith.constant 0 : index
    %c0_27 = arith.constant 0 : index
    %40 = vector.load %arg10[%c0_26, %c0_27] : memref<8x2xf32, #tpu.memory_space<vmem>>, vector<8x2xf32>
    tpu.vector_store %arg10[%c0_26, %c0_27], %39 {strides = array<i32>} : memref<8x2xf32, #tpu.memory_space<vmem>>, vector<8x2xf32>,
    return
  }
  func.func @transform_0(%arg0: i32) -> (i32, i32) {
    %c0_i32 = arith.constant 0 : i32
    %c0_i32_0 = arith.constant 0 : i32
    return %arg0, %c0_i32 : i32, i32
  }
  func.func @transform_1(%arg0: i32) -> (i32, i32) {
    %c0_i32 = arith.constant 0 : i32
    %c0_i32_0 = arith.constant 0 : i32
    %c0_i32_1 = arith.constant 0 : i32
    return %c0_i32, %c0_i32_0 : i32, i32
  }
  func.func @transform_2(%arg0: i32) -> (i32, i32) {
    %c0_i32 = arith.constant 0 : i32
    %c0_i32_0 = arith.constant 0 : i32
    %c0_i32_1 = arith.constant 0 : i32
    return %c0_i32, %c0_i32_0 : i32, i32
  }
  func.func @transform_3(%arg0: i32) -> (i32, i32) {
    %c0_i32 = arith.constant 0 : i32
    %c0_i32_0 = arith.constant 0 : i32
    %c0_i32_1 = arith.constant 0 : i32
    return %c0_i32, %c0_i32_0 : i32, i32
  }
  func.func @transform_4(%arg0: i32) -> (i32, i32) {
    %c0_i32 = arith.constant 0 : i32
    %c0_i32_0 = arith.constant 0 : i32
    %c0_i32_1 = arith.constant 0 : i32
    return %c0_i32, %c0_i32_0 : i32, i32
  }
  func.func @transform_5(%arg0: i32) -> (i32, i32) {
    %c0_i32 = arith.constant 0 : i32
    %c0_i32_0 = arith.constant 0 : i32
    %c0_i32_1 = arith.constant 0 : i32
    return %c0_i32, %c0_i32_0 : i32, i32
  }
  func.func @transform_6(%arg0: i32) -> (i32, i32) {
    %c0_i32 = arith.constant 0 : i32
    %c0_i32_0 = arith.constant 0 : i32
    %c0_i32_1 = arith.constant 0 : i32
    return %c0_i32, %c0_i32_0 : i32, i32
  }
  func.func @transform_7(%arg0: i32) -> (i32, i32) {
    %c0_i32 = arith.constant 0 : i32
    %c0_i32_0 = arith.constant 0 : i32
    %c0_i32_1 = arith.constant 0 : i32
    return %c0_i32, %c0_i32_0 : i32, i32
  }
  func.func @transform_8(%arg0: i32) -> (i32, i32) {
    %c0_i32 = arith.constant 0 : i32
    %c0_i32_0 = arith.constant 0 : i32
    %c0_i32_1 = arith.constant 0 : i32
    return %c0_i32, %c0_i32_0 : i32, i32
  }
  func.func @transform_9(%arg0: i32) -> (i32, i32) {
    %c0_i32 = arith.constant 0 : i32
    %c0_i32_0 = arith.constant 0 : i32
    return %arg0, %c0_i32 : i32, i32
  }
}

</mosaic_0001>

<llo_original>
// kernel: better_classifier_forward.1
$region0: #{better_classifier_forward.1}
  #allocation0 [shape = 'u32[]', space=smem, size = 0x4, offset = 0x4, fixed_abs, tag = 'smem constant byte address 0x4 - core index']
  #allocation1 [shape = 'u32[144,128]{1,0:T(1,128)}', space=vmem, size = 0x12000, scoped, tag = 'internal scratch']
  %s0 = inlined_call_operand.vmem [shape: f32[8,285], index: 0, kind: input, shape index: {}]
  %s1 = inlined_call_operand.vmem [shape: bf16[285,200], index: 1, kind: input, shape index: {}]
  %s2 = inlined_call_operand.vmem [shape: f32[1,200], index: 2, kind: input, shape index: {}]
  %s3 = inlined_call_operand.vmem [shape: bf16[200,50], index: 3, kind: input, shape index: {}]
  %s4 = inlined_call_operand.vmem [shape: f32[1,50], index: 4, kind: input, shape index: {}]
  %s5 = inlined_call_operand.vmem [shape: bf16[50,20], index: 5, kind: input, shape index: {}]
  %s6 = inlined_call_operand.vmem [shape: f32[1,20], index: 6, kind: input, shape index: {}]
  %s7 = inlined_call_operand.vmem [shape: bf16[20,2], index: 7, kind: input, shape index: {}]
  %s8 = inlined_call_operand.vmem [shape: f32[1,2], index: 8, kind: input, shape index: {}]
  %s9 = inlined_call_operand.vmem [shape: f32[8,2], index: 9, kind: output, shape index: {}]
  %s10 = sld [smem:[#allocation0]]
  $region46: #{better_classifier_forward.1} parent=0
    _
  %s12 = ssub.s32 1, %s10
  %s13 = scalar_select 0, %s12, %s10
  // Predicated region
  $region2: #{better_classifier_forward.1} parent=0 // pred_check
    _
  $region3: #{better_classifier_forward.1} parent=0 // pred_check_branch
    %15 = sbr.rel (0) target = $region5
  $region4: #{better_classifier_forward.1} parent=0 // pred_region
    _
  $region5: #{better_classifier_forward.1} parent=0 // pred_fallthru
    _
  // Predicated region
  $region6: #{better_classifier_forward.1} parent=0 // pred_check
    _
  $region7: #{better_classifier_forward.1} parent=0 // pred_check_branch
    %17 = sbr.rel (0) target = $region9
  $region8: #{better_classifier_forward.1} parent=0 // pred_region
    _
  $region9: #{better_classifier_forward.1} parent=0 // pred_fallthru
    _
  // Predicated region
  $region10: #{better_classifier_forward.1} parent=0 // pred_check
    _
  $region11: #{better_classifier_forward.1} parent=0 // pred_check_branch
    %19 = sbr.rel (0) target = $region13
  $region12: #{better_classifier_forward.1} parent=0 // pred_region
    _
  $region13: #{better_classifier_forward.1} parent=0 // pred_fallthru
    _
  // Predicated region
  $region14: #{better_classifier_forward.1} parent=0 // pred_check
    _
  $region15: #{better_classifier_forward.1} parent=0 // pred_check_branch
    %21 = sbr.rel (0) target = $region17
  $region16: #{better_classifier_forward.1} parent=0 // pred_region
    _
  $region17: #{better_classifier_forward.1} parent=0 // pred_fallthru
    _
  // Predicated region
  $region18: #{better_classifier_forward.1} parent=0 // pred_check
    _
  $region19: #{better_classifier_forward.1} parent=0 // pred_check_branch
    %23 = sbr.rel (0) target = $region21
  $region20: #{better_classifier_forward.1} parent=0 // pred_region
    _
  $region21: #{better_classifier_forward.1} parent=0 // pred_fallthru
    _
  // Predicated region
  $region22: #{better_classifier_forward.1} parent=0 // pred_check
    _
  $region23: #{better_classifier_forward.1} parent=0 // pred_check_branch
    %25 = sbr.rel (0) target = $region25
  $region24: #{better_classifier_forward.1} parent=0 // pred_region
    _
  $region25: #{better_classifier_forward.1} parent=0 // pred_fallthru
    _
  // Predicated region
  $region26: #{better_classifier_forward.1} parent=0 // pred_check
    _
  $region27: #{better_classifier_forward.1} parent=0 // pred_check_branch
    %27 = sbr.rel (0) target = $region29
  $region28: #{better_classifier_forward.1} parent=0 // pred_region
    _
  $region29: #{better_classifier_forward.1} parent=0 // pred_fallthru
    _
  // Predicated region
  $region30: #{better_classifier_forward.1} parent=0 // pred_check
    _
  $region31: #{better_classifier_forward.1} parent=0 // pred_check_branch
    %29 = sbr.rel (0) target = $region33
  $region32: #{better_classifier_forward.1} parent=0 // pred_region
    _
  $region33: #{better_classifier_forward.1} parent=0 // pred_fallthru
    _
  // Predicated region
  $region34: #{better_classifier_forward.1} parent=0 // pred_check
    _
  $region35: #{better_classifier_forward.1} parent=0 // pred_check_branch
    %31 = sbr.rel (0) target = $region37
  $region36: #{better_classifier_forward.1} parent=0 // pred_region
    _
  $region37: #{better_classifier_forward.1} parent=0 // pred_fallthru
    _
  %v33 = vld [vmem:[%s0] sm:$0xff]
  %v34 = vld [vmem:[%s0 + $0x8] sm:$0xff]
  %v35 = vld [vmem:[%s0 + $0x10] sm:$0xff]
  %v36 = vpack.c.bf16 %v33, %v33
  %v37 = vpack.c.bf16 %v34, %v34
  %v38 = vpack.c.bf16 %v35, %v35
  %v39 = vld [vmem:[%s1] sm:$0xff]
  %v40 = vld [vmem:[%s1 + $0x8] sm:$0xff]
  %v41 = vld [vmem:[%s1 + $0x10] sm:$0xff]
  %v42 = vld [vmem:[%s1 + $0x18] sm:$0xff]
  %v43 = vld [vmem:[%s1 + $0x20] sm:$0xff]
  %v44 = vld [vmem:[%s1 + $0x28] sm:$0xff]
  %v45 = vld [vmem:[%s1 + $0x30] sm:$0xff]
  %v46 = vld [vmem:[%s1 + $0x38] sm:$0xff]
  %v47 = vld [vmem:[%s1 + $0x40] sm:$0xff]
  %v48 = vld [vmem:[%s1 + $0x48] sm:$0xff]
  %v49 = vld [vmem:[%s1 + $0x50] sm:$0xff]
  %v50 = vld [vmem:[%s1 + $0x58] sm:$0xff]
  %v51 = vld [vmem:[%s1 + $0x60] sm:$0xff]
  %v52 = vld [vmem:[%s1 + $0x68] sm:$0xff]
  %v53 = vld [vmem:[%s1 + $0x70] sm:$0xff]
  %v54 = vld [vmem:[%s1 + $0x78] sm:$0xff]
  %v55 = vld [vmem:[%s1 + $0x80] sm:$0xff]
  %v56 = vld [vmem:[%s1 + $0x88] sm:$0xff]
  %v57 = vld [vmem:[%s1 + $0x90] sm:$0xff]
  %v58 = vld [vmem:[%s1 + $0x98] sm:$0xff]
  %v59 = vld [vmem:[%s1 + $0xa0] sm:$0xff]
  %v60 = vld [vmem:[%s1 + $0xa8] sm:$0xff]
  %v61 = vld [vmem:[%s1 + $0xb0] sm:$0xff]
  %v62 = vld [vmem:[%s1 + $0xb8] sm:$0xff]
  %v63 = vld [vmem:[%s1 + $0xc0] sm:$0xff]
  %v64 = vld [vmem:[%s1 + $0xc8] sm:$0xff]
  %v65 = vld [vmem:[%s1 + $0xd0] sm:$0xff]
  %v66 = vld [vmem:[%s1 + $0xd8] sm:$0xff]
  %v67 = vld [vmem:[%s1 + $0xe0] sm:$0xff]
  %v68 = vld [vmem:[%s1 + $0xe8] sm:$0xff]
  %v69 = vld [vmem:[%s1 + $0xf0] sm:$0xff]
  %v70 = vld [vmem:[%s1 + $0xf8] sm:$0xff]
  %v71 = vld [vmem:[%s1 + $0x100] sm:$0xff]
  %v72 = vld [vmem:[%s1 + $0x108] sm:$0xff]
  %v73 = vld [vmem:[%s1 + $0x110] sm:$0xff]
  %v74 = vld [vmem:[%s1 + $0x118] sm:$0x77]
  %v75 = vld [vmem:[%s2] sm:$0x3]
  %v77 = vlaneseq
  %v78 = vshrl.u32 %v77, 7
  %v79 = vsub.s32 0, %v78
  %v80 = vrot.slane %v75, %v79
  %v81 = vlaneseq
  %v82 = vshrl.u32 %v81, 7
  %v83 = vsub.s32 1, %v82
  %v84 = vrot.slane %v75, %v83
  %v123 = vunpack.c.l.b16 %v39
  %v124 = vunpack.c.h.b16 %v39
  %v125 = vunpack.c.l.b16 %v40
  %v126 = vunpack.c.h.b16 %v40
  %v127 = vunpack.c.l.b16 %v41
  %v128 = vunpack.c.h.b16 %v41
  %v129 = vunpack.c.l.b16 %v42
  %v130 = vunpack.c.h.b16 %v42
  %v131 = vunpack.c.l.b16 %v43
  %v132 = vunpack.c.h.b16 %v43
  %v133 = vunpack.c.l.b16 %v44
  %v134 = vunpack.c.h.b16 %v44
  %v135 = vunpack.c.l.b16 %v45
  %v136 = vunpack.c.h.b16 %v45
  %v137 = vunpack.c.l.b16 %v46
  %v138 = vunpack.c.h.b16 %v46
  %v139 = vunpack.c.l.b16 %v47
  %v140 = vunpack.c.h.b16 %v47
  %v141 = vunpack.c.l.b16 %v48
  %v142 = vunpack.c.h.b16 %v48
  %v143 = vunpack.c.l.b16 %v49
  %v144 = vunpack.c.h.b16 %v49
  %v145 = vunpack.c.l.b16 %v50
  %v146 = vunpack.c.h.b16 %v50
  %v147 = vunpack.c.l.b16 %v51
  %v148 = vunpack.c.h.b16 %v51
  %v149 = vunpack.c.l.b16 %v52
  %v150 = vunpack.c.h.b16 %v52
  %v151 = vunpack.c.l.b16 %v53
  %v152 = vunpack.c.h.b16 %v53
  %v153 = vunpack.c.l.b16 %v54
  %v154 = vunpack.c.h.b16 %v54
  %v155 = vunpack.c.l.b16 %v55
  %v156 = vunpack.c.h.b16 %v55
  %v157 = vunpack.c.l.b16 %v56
  %v158 = vunpack.c.h.b16 %v56
  %v159 = vunpack.c.l.b16 %v57
  %v160 = vunpack.c.h.b16 %v57
  %v161 = vunpack.c.l.b16 %v58
  %v162 = vunpack.c.h.b16 %v58
  %v163 = vunpack.c.l.b16 %v59
  %v164 = vunpack.c.h.b16 %v59
  %v165 = vunpack.c.l.b16 %v60
  %v166 = vunpack.c.h.b16 %v60
  %v167 = vunpack.c.l.b16 %v61
  %v168 = vunpack.c.h.b16 %v61
  %v169 = vunpack.c.l.b16 %v62
  %v170 = vunpack.c.h.b16 %v62
  %v171 = vunpack.c.l.b16 %v63
  %v172 = vunpack.c.h.b16 %v63
  %v173 = vunpack.c.l.b16 %v64
  %v174 = vunpack.c.h.b16 %v64
  %v175 = vunpack.c.l.b16 %v65
  %v176 = vunpack.c.h.b16 %v65
  %v177 = vunpack.c.l.b16 %v66
  %v178 = vunpack.c.h.b16 %v66
  %v179 = vunpack.c.l.b16 %v67
  %v180 = vunpack.c.h.b16 %v67
  %v181 = vunpack.c.l.b16 %v68
  %v182 = vunpack.c.h.b16 %v68
  %v183 = vunpack.c.l.b16 %v69
  %v184 = vunpack.c.h.b16 %v69
  %v185 = vunpack.c.l.b16 %v70
  %v186 = vunpack.c.h.b16 %v70
  %v187 = vunpack.c.l.b16 %v71
  %v188 = vunpack.c.h.b16 %v71
  %v189 = vunpack.c.l.b16 %v72
  %v190 = vunpack.c.h.b16 %v72
  %v191 = vunpack.c.l.b16 %v73
  %v192 = vunpack.c.h.b16 %v73
  %v193 = vunpack.c.l.b16 %v74
  %v194 = vunpack.c.h.b16 %v74
  %v195 = vpack.c.b16 %v125, %v123
  %v196 = vpack.c.b16 %v126, %v124
  %v197 = vpack.c.b16 %v129, %v127
  %v198 = vpack.c.b16 %v130, %v128
  %v199 = vpack.c.b16 %v133, %v131
  %v200 = vpack.c.b16 %v134, %v132
  %v201 = vpack.c.b16 %v137, %v135
  %v202 = vpack.c.b16 %v138, %v136
  %v203 = vpack.c.b16 %v141, %v139
  %v204 = vpack.c.b16 %v142, %v140
  %v205 = vpack.c.b16 %v145, %v143
  %v206 = vpack.c.b16 %v146, %v144
  %v207 = vpack.c.b16 %v149, %v147
  %v208 = vpack.c.b16 %v150, %v148
  %v209 = vpack.c.b16 %v153, %v151
  %v210 = vpack.c.b16 %v154, %v152
  %v211 = vpack.c.b16 %v157, %v155
  %v212 = vpack.c.b16 %v158, %v156
  %v213 = vpack.c.b16 %v161, %v159
  %v214 = vpack.c.b16 %v162, %v160
  %v215 = vpack.c.b16 %v165, %v163
  %v216 = vpack.c.b16 %v166, %v164
  %v217 = vpack.c.b16 %v169, %v167
  %v218 = vpack.c.b16 %v170, %v168
  %v219 = vpack.c.b16 %v173, %v171
  %v220 = vpack.c.b16 %v174, %v172
  %v221 = vpack.c.b16 %v177, %v175
  %v222 = vpack.c.b16 %v178, %v176
  %v223 = vpack.c.b16 %v181, %v179
  %v224 = vpack.c.b16 %v182, %v180
  %v225 = vpack.c.b16 %v185, %v183
  %v226 = vpack.c.b16 %v186, %v184
  %v227 = vpack.c.b16 %v189, %v187
  %v228 = vpack.c.b16 %v190, %v188
  %v229 = vpack.c.b16 %v193, %v191
  %v230 = vpack.c.b16 %v194, %v192
  %vm265 = vcmask 236544
  %v267 = vsel %vm265, %v38, 0
  %vm269 = vcmask 1045504
  %vm270 = vcmask 1046528
  %v271 = vsel %vm269, 4294967295, 65535
  %v272 = vsel %vm270, %v271, 0
  %v274 = vand.u32 %v229, %v272
  %v277 = vand.u32 %v230, %v272
  %279 = vmatprep.subr.bf16.mxu0 %v196
  %280 = vmatpush1.bf16.msra.mxu0 %v195
  %281 = vmatprep.subr.bf16.mxu0 %v198
  %282 = vmatpush1.bf16.msra.mxu0 %v197
  %283 = vmatprep.subr.bf16.mxu0 %v200
  %284 = vmatpush1.bf16.msra.mxu0 %v199
  %285 = vmatprep.subr.bf16.mxu0 %v202
  %286 = vmatpush1.bf16.msra.mxu0 %v201
  %287 = vmatprep.subr.bf16.mxu0 %v204
  %288 = vmatpush1.bf16.msra.mxu0 %v203
  %289 = vmatprep.subr.bf16.mxu0 %v206
  %290 = vmatpush1.bf16.msra.mxu0 %v205
  %291 = vmatprep.subr.bf16.mxu0 %v208
  %292 = vmatpush1.bf16.msra.mxu0 %v207
  %293 = vmatprep.subr.bf16.mxu0 %v210
  %294 = vmatpush1.bf16.msra.mxu0 %v209
  %295 = vmatprep.subr.bf16.mxu0 %v212
  %296 = vmatpush1.bf16.msra.mxu0 %v211
  %297 = vmatprep.subr.bf16.mxu0 %v214
  %298 = vmatpush1.bf16.msra.mxu0 %v213
  %299 = vmatprep.subr.bf16.mxu0 %v216
  %300 = vmatpush1.bf16.msra.mxu0 %v215
  %301 = vmatprep.subr.bf16.mxu0 %v218
  %302 = vmatpush1.bf16.msra.mxu0 %v217
  %303 = vmatprep.subr.bf16.mxu0 %v220
  %304 = vmatpush1.bf16.msra.mxu0 %v219
  %305 = vmatprep.subr.bf16.mxu0 %v222
  %306 = vmatpush1.bf16.msra.mxu0 %v221
  %307 = vmatprep.subr.bf16.mxu0 %v224
  %308 = vmatpush1.bf16.msra.mxu0 %v223
  %309 = vmatprep.subr.bf16.mxu0 %v226
  %310 = vmatpush1.bf16.msra.mxu0 %v225
  %311 = vmatprep.mubr.bf16.mxu0 %v37
  %312 = vmatmul.mubr.bf16.gmra.mrb[0].mxu0 %v36
  %v313 = vpop.f32.mrb[0].mxu0
  %v314 = vadd.f32 %v80, %v313
  %v315 = vpop.f32.mrb[0].mxu0
  %v316 = vadd.f32 %v84, %v315
  %v317 = vpop.f32.mrb[0].mxu0
  %v318 = vpop.f32.mrb[0].mxu0
  %319 = vdwg.mxu0
  %320 = vmatprep.subr.bf16.mxu0 %v228
  %321 = vmatpush1.bf16.msra.mxu0 %v227
  %322 = vmatprep.subr.bf16.mxu0 %v277
  %323 = vmatpush1.bf16.msra.mxu0 %v274
  %324 = vmatprep.subr.bf16.mxu0 0
  %325 = vmatpush1.bf16.msra.mxu0 0
  %326 = vmatprep.subr.bf16.mxu0 0
  %327 = vmatpush1.bf16.msra.mxu0 0
  %328 = vmatprep.subr.bf16.mxu0 0
  %329 = vmatpush1.bf16.msra.mxu0 0
  %330 = vmatprep.subr.bf16.mxu0 0
  %331 = vmatpush1.bf16.msra.mxu0 0
  %332 = vmatprep.subr.bf16.mxu0 0
  %333 = vmatpush1.bf16.msra.mxu0 0
  %334 = vmatprep.subr.bf16.mxu0 0
  %335 = vmatpush1.bf16.msra.mxu0 0
  %336 = vmatprep.subr.bf16.mxu0 0
  %337 = vmatpush1.bf16.msra.mxu0 0
  %338 = vmatprep.subr.bf16.mxu0 0
  %339 = vmatpush1.bf16.msra.mxu0 0
  %340 = vmatprep.subr.bf16.mxu0 0
  %341 = vmatpush1.bf16.msra.mxu0 0
  %342 = vmatprep.subr.bf16.mxu0 0
  %343 = vmatpush1.bf16.msra.mxu0 0
  %344 = vmatprep.subr.bf16.mxu0 0
  %345 = vmatpush1.bf16.msra.mxu0 0
  %346 = vmatprep.subr.bf16.mxu0 0
  %347 = vmatpush1.bf16.msra.mxu0 0
  %348 = vmatprep.subr.bf16.mxu0 0
  %349 = vmatpush1.bf16.msra.mxu0 0
  %350 = vmatprep.subr.bf16.mxu0 0
  %351 = vmatpush1.bf16.msra.mxu0 0
  %352 = vmatprep.mubr.bf16.mxu0 0
  %353 = vmatmul.mubr.bf16.gmra.mrb[0].mxu0 %v267
  %v354 = vpop.f32.mrb[0].mxu0
  %v355 = vadd.f32 %v314, %v354
  %v356 = vpop.f32.mrb[0].mxu0
  %v357 = vadd.f32 %v316, %v356
  %v358 = vpop.f32.mrb[0].mxu0
  %v359 = vpop.f32.mrb[0].mxu0
  %360 = vdwg.mxu0
  %vm361 = vcmp.ge.f32.partialorder %v355, 0.0
  %vm362 = vcmp.ge.f32.partialorder %v357, 0.0
  %v363 = vmul.f32 %v355, 0.01
  %v364 = vmul.f32 %v357, 0.01
  %v365 = vsel %vm361, %v355, %v363
  %v366 = vsel %vm362, %v357, %v364
  %v367 = vpack.c.bf16 %v365, %v365
  %v368 = vpack.c.bf16 %v366, %v366
  %v369 = vld [vmem:[%s3] sm:$0xf]
  %v370 = vld [vmem:[%s3 + $0x4] sm:$0xf]
  %v371 = vld [vmem:[%s3 + $0x8] sm:$0xf]
  %v372 = vld [vmem:[%s3 + $0xc] sm:$0xf]
  %v373 = vld [vmem:[%s3 + $0x10] sm:$0xf]
  %v374 = vld [vmem:[%s3 + $0x14] sm:$0xf]
  %v375 = vld [vmem:[%s3 + $0x18] sm:$0xf]
  %v376 = vld [vmem:[%s3 + $0x1c] sm:$0xf]
  %v377 = vld [vmem:[%s3 + $0x20] sm:$0xf]
  %v378 = vld [vmem:[%s3 + $0x24] sm:$0xf]
  %v379 = vld [vmem:[%s3 + $0x28] sm:$0xf]
  %v380 = vld [vmem:[%s3 + $0x2c] sm:$0xf]
  %v381 = vld [vmem:[%s3 + $0x30] sm:$0xf]
  %v382 = vld [vmem:[%s3 + $0x34] sm:$0xf]
  %v383 = vld [vmem:[%s3 + $0x38] sm:$0xf]
  %v384 = vld [vmem:[%s3 + $0x3c] sm:$0xf]
  %v385 = vld [vmem:[%s3 + $0x40] sm:$0xf]
  %v386 = vld [vmem:[%s3 + $0x44] sm:$0xf]
  %v387 = vld [vmem:[%s3 + $0x48] sm:$0xf]
  %v388 = vld [vmem:[%s3 + $0x4c] sm:$0xf]
  %v389 = vld [vmem:[%s3 + $0x50] sm:$0xf]
  %v390 = vld [vmem:[%s3 + $0x54] sm:$0xf]
  %v391 = vld [vmem:[%s3 + $0x58] sm:$0xf]
  %v392 = vld [vmem:[%s3 + $0x5c] sm:$0xf]
  %v393 = vld [vmem:[%s3 + $0x60] sm:$0xf]
  %v394 = vld [vmem:[%s4] sm:$0x1]
  %v396 = vlaneseq
  %v397 = vshrl.u32 %v396, 7
  %v398 = vsub.s32 0, %v397
  %v399 = vrot.slane %v394, %v398
  %v426 = vunpack.c.l.b16 %v369
  %v427 = vunpack.c.l.b16 %v370
  %v428 = vunpack.c.l.b16 %v371
  %v429 = vunpack.c.l.b16 %v372
  %v430 = vunpack.c.l.b16 %v373
  %v431 = vunpack.c.l.b16 %v374
  %v432 = vunpack.c.l.b16 %v375
  %v433 = vunpack.c.l.b16 %v376
  %v434 = vunpack.c.l.b16 %v377
  %v435 = vunpack.c.l.b16 %v378
  %v436 = vunpack.c.l.b16 %v379
  %v437 = vunpack.c.l.b16 %v380
  %v438 = vunpack.c.l.b16 %v381
  %v439 = vunpack.c.l.b16 %v382
  %v440 = vunpack.c.l.b16 %v383
  %v441 = vunpack.c.l.b16 %v384
  %v442 = vunpack.c.l.b16 %v385
  %v443 = vunpack.c.l.b16 %v386
  %v444 = vunpack.c.l.b16 %v387
  %v445 = vunpack.c.l.b16 %v388
  %v446 = vunpack.c.l.b16 %v389
  %v447 = vunpack.c.l.b16 %v390
  %v448 = vunpack.c.l.b16 %v391
  %v449 = vunpack.c.l.b16 %v392
  %v450 = vunpack.c.l.b16 %v393
  %v451 = vpack.c.b16 %v427, %v426
  %v452 = vpack.c.b16 %v429, %v428
  %v453 = vpack.c.b16 %v431, %v430
  %v454 = vpack.c.b16 %v433, %v432
  %v455 = vpack.c.b16 %v435, %v434
  %v456 = vpack.c.b16 %v437, %v436
  %v457 = vpack.c.b16 %v439, %v438
  %v458 = vpack.c.b16 %v441, %v440
  %v459 = vpack.c.b16 %v443, %v442
  %v460 = vpack.c.b16 %v445, %v444
  %v461 = vpack.c.b16 %v447, %v446
  %v462 = vpack.c.b16 %v449, %v448
  %v463 = vpack.c.b16 %v450, %v450
  %vm476 = vcmask 588800
  %v478 = vsel %vm476, %v368, 0
  %vm480 = vcmask 1043456
  %v482 = vsel %vm480, %v463, 0
  %484 = vmatprep.subr.bf16.mxu0 0
  %485 = vmatpush1.bf16.msra.mxu0 %v451
  %486 = vmatprep.subr.bf16.mxu0 0
  %487 = vmatpush1.bf16.msra.mxu0 %v452
  %488 = vmatprep.subr.bf16.mxu0 0
  %489 = vmatpush1.bf16.msra.mxu0 %v453
  %490 = vmatprep.subr.bf16.mxu0 0
  %491 = vmatpush1.bf16.msra.mxu0 %v454
  %492 = vmatprep.subr.bf16.mxu0 0
  %493 = vmatpush1.bf16.msra.mxu0 %v455
  %494 = vmatprep.subr.bf16.mxu0 0
  %495 = vmatpush1.bf16.msra.mxu0 %v456
  %496 = vmatprep.subr.bf16.mxu0 0
  %497 = vmatpush1.bf16.msra.mxu0 %v457
  %498 = vmatprep.subr.bf16.mxu0 0
  %499 = vmatpush1.bf16.msra.mxu0 %v458
  %500 = vmatprep.subr.bf16.mxu0 0
  %501 = vmatpush1.bf16.msra.mxu0 %v459
  %502 = vmatprep.subr.bf16.mxu0 0
  %503 = vmatpush1.bf16.msra.mxu0 %v460
  %504 = vmatprep.subr.bf16.mxu0 0
  %505 = vmatpush1.bf16.msra.mxu0 %v461
  %506 = vmatprep.subr.bf16.mxu0 0
  %507 = vmatpush1.bf16.msra.mxu0 %v462
  %508 = vmatprep.subr.bf16.mxu0 0
  %509 = vmatpush1.bf16.msra.mxu0 %v482
  %510 = vmatprep.subr.bf16.mxu0 0
  %511 = vmatpush1.bf16.msra.mxu0 0
  %512 = vmatprep.subr.bf16.mxu0 0
  %513 = vmatpush1.bf16.msra.mxu0 0
  %514 = vmatprep.subr.bf16.mxu0 0
  %515 = vmatpush1.bf16.msra.mxu0 0
  %516 = vmatprep.mubr.bf16.mxu0 %v478
  %517 = vmatmul.mubr.bf16.gmra.mrb[0].mxu0 %v367
  %v518 = vpop.f32.mrb[0].mxu0
  %v519 = vadd.f32 %v399, %v518
  %v520 = vpop.f32.mrb[0].mxu0
  %v521 = vpop.f32.mrb[0].mxu0
  %v522 = vpop.f32.mrb[0].mxu0
  %523 = vdwg.mxu0
  %vm524 = vcmp.ge.f32.partialorder %v519, 0.0
  %v525 = vmul.f32 %v519, 0.01
  %v526 = vsel %vm524, %v519, %v525
  %v527 = vpack.c.bf16 %v526, %v526
  %v528 = vld [vmem:[%s5] sm:$0xf]
  %v529 = vld [vmem:[%s5 + $0x4] sm:$0xf]
  %v530 = vld [vmem:[%s5 + $0x8] sm:$0xf]
  %v531 = vld [vmem:[%s5 + $0xc] sm:$0xf]
  %v532 = vld [vmem:[%s5 + $0x10] sm:$0xf]
  %v533 = vld [vmem:[%s5 + $0x14] sm:$0xf]
  %v534 = vld [vmem:[%s5 + $0x18] sm:$0x1]
  %v535 = vld [vmem:[%s6] sm:$0x1]
  %v537 = vlaneseq
  %v538 = vshrl.u32 %v537, 7
  %v539 = vsub.s32 0, %v538
  %v540 = vrot.slane %v535, %v539
  %v549 = vunpack.c.l.b16 %v528
  %v550 = vunpack.c.l.b16 %v529
  %v551 = vunpack.c.l.b16 %v530
  %v552 = vunpack.c.l.b16 %v531
  %v553 = vunpack.c.l.b16 %v532
  %v554 = vunpack.c.l.b16 %v533
  %v555 = vunpack.c.l.b16 %v534
  %v556 = vpack.c.b16 %v550, %v549
  %v557 = vpack.c.b16 %v552, %v551
  %v558 = vpack.c.b16 %v554, %v553
  %v559 = vpack.c.b16 %v555, %v555
  %vm563 = vcmask 408576
  %v565 = vsel %vm563, %v527, 0
  %vm567 = vcmask 1040384
  %v569 = vsel %vm567, %v559, 0
  %571 = vmatprep.subr.bf16.mxu0 0
  %572 = vmatpush1.bf16.msra.mxu0 %v556
  %573 = vmatprep.subr.bf16.mxu0 0
  %574 = vmatpush1.bf16.msra.mxu0 %v557
  %575 = vmatprep.subr.bf16.mxu0 0
  %576 = vmatpush1.bf16.msra.mxu0 %v558
  %577 = vmatprep.subr.bf16.mxu0 0
  %578 = vmatpush1.bf16.msra.mxu0 %v569
  %579 = vmatprep.subr.bf16.mxu0 0
  %580 = vmatpush1.bf16.msra.mxu0 0
  %581 = vmatprep.subr.bf16.mxu0 0
  %582 = vmatpush1.bf16.msra.mxu0 0
  %583 = vmatprep.subr.bf16.mxu0 0
  %584 = vmatpush1.bf16.msra.mxu0 0
  %585 = vmatprep.subr.bf16.mxu0 0
  %586 = vmatpush1.bf16.msra.mxu0 0
  %587 = vmatprep.subr.bf16.mxu0 0
  %588 = vmatpush1.bf16.msra.mxu0 0
  %589 = vmatprep.subr.bf16.mxu0 0
  %590 = vmatpush1.bf16.msra.mxu0 0
  %591 = vmatprep.subr.bf16.mxu0 0
  %592 = vmatpush1.bf16.msra.mxu0 0
  %593 = vmatprep.subr.bf16.mxu0 0
  %594 = vmatpush1.bf16.msra.mxu0 0
  %595 = vmatprep.subr.bf16.mxu0 0
  %596 = vmatpush1.bf16.msra.mxu0 0
  %597 = vmatprep.subr.bf16.mxu0 0
  %598 = vmatpush1.bf16.msra.mxu0 0
  %599 = vmatprep.subr.bf16.mxu0 0
  %600 = vmatpush1.bf16.msra.mxu0 0
  %601 = vmatprep.subr.bf16.mxu0 0
  %602 = vmatpush1.bf16.msra.mxu0 0
  %603 = vmatprep.mubr.bf16.mxu0 0
  %604 = vmatmul.mubr.bf16.gmra.mrb[0].mxu0 %v565
  %v605 = vpop.f32.mrb[0].mxu0
  %v606 = vadd.f32 %v540, %v605
  %v607 = vpop.f32.mrb[0].mxu0
  %v608 = vpop.f32.mrb[0].mxu0
  %v609 = vpop.f32.mrb[0].mxu0
  %610 = vdwg.mxu0
  %vm611 = vcmp.ge.f32.partialorder %v606, 0.0
  %v612 = vmul.f32 %v606, 0.01
  %v613 = vsel %vm611, %v606, %v612
  %v614 = vpack.c.bf16 %v613, %v613
  %v615 = vld [vmem:[%s7] sm:$0xf]
  %v616 = vld [vmem:[%s7 + $0x4] sm:$0xf]
  %v617 = vld [vmem:[%s7 + $0x8] sm:$0x3]
  %v618 = vld [vmem:[%s8] sm:$0x1]
  %v620 = vlaneseq
  %v621 = vshrl.u32 %v620, 7
  %v622 = vsub.s32 0, %v621
  %v623 = vrot.slane %v618, %v622
  %v628 = vunpack.c.l.b16 %v615
  %v629 = vunpack.c.l.b16 %v616
  %v630 = vunpack.c.l.b16 %v617
  %v631 = vpack.c.b16 %v629, %v628
  %v632 = vpack.c.b16 %v630, %v630
  %vm634 = vcmask 162816
  %v636 = vsel %vm634, %v614, 0
  %vm638 = vcmask 1041408
  %v640 = vsel %vm638, %v632, 0
  %642 = vmatprep.subr.bf16.mxu0 0
  %643 = vmatpush1.bf16.msra.mxu0 %v631
  %644 = vmatprep.subr.bf16.mxu0 0
  %645 = vmatpush1.bf16.msra.mxu0 %v640
  %646 = vmatprep.subr.bf16.mxu0 0
  %647 = vmatpush1.bf16.msra.mxu0 0
  %648 = vmatprep.subr.bf16.mxu0 0
  %649 = vmatpush1.bf16.msra.mxu0 0
  %650 = vmatprep.subr.bf16.mxu0 0
  %651 = vmatpush1.bf16.msra.mxu0 0
  %652 = vmatprep.subr.bf16.mxu0 0
  %653 = vmatpush1.bf16.msra.mxu0 0
  %654 = vmatprep.subr.bf16.mxu0 0
  %655 = vmatpush1.bf16.msra.mxu0 0
  %656 = vmatprep.subr.bf16.mxu0 0
  %657 = vmatpush1.bf16.msra.mxu0 0
  %658 = vmatprep.subr.bf16.mxu0 0
  %659 = vmatpush1.bf16.msra.mxu0 0
  %660 = vmatprep.subr.bf16.mxu0 0
  %661 = vmatpush1.bf16.msra.mxu0 0
  %662 = vmatprep.subr.bf16.mxu0 0
  %663 = vmatpush1.bf16.msra.mxu0 0
  %664 = vmatprep.subr.bf16.mxu0 0
  %665 = vmatpush1.bf16.msra.mxu0 0
  %666 = vmatprep.subr.bf16.mxu0 0
  %667 = vmatpush1.bf16.msra.mxu0 0
  %668 = vmatprep.subr.bf16.mxu0 0
  %669 = vmatpush1.bf16.msra.mxu0 0
  %670 = vmatprep.subr.bf16.mxu0 0
  %671 = vmatpush1.bf16.msra.mxu0 0
  %672 = vmatprep.subr.bf16.mxu0 0
  %673 = vmatpush1.bf16.msra.mxu0 0
  %674 = vmatprep.mubr.bf16.mxu0 0
  %675 = vmatmul.mubr.bf16.gmra.mrb[0].mxu0 %v636
  %v676 = vpop.f32.mrb[0].mxu0
  %v677 = vadd.f32 %v623, %v676
  %v678 = vpop.f32.mrb[0].mxu0
  %v679 = vpop.f32.mrb[0].mxu0
  %v680 = vpop.f32.mrb[0].mxu0
  %681 = vdwg.mxu0
  %vm682 = vcmask 15360
  %683 = vst.msk [vmem:[%s9] sm:$0xff] %vm682, %v677
  // Predicated region
  $region38: #{better_classifier_forward.1} parent=0 // pred_check
    _
  $region39: #{better_classifier_forward.1} parent=0 // pred_check_branch
    %685 = sbr.rel (0) target = $region41
  $region40: #{better_classifier_forward.1} parent=0 // pred_region
    _
  $region41: #{better_classifier_forward.1} parent=0 // pred_fallthru
    _
  // Predicated region
  $region42: #{better_classifier_forward.1} parent=0 // pred_check
    _
  $region43: #{better_classifier_forward.1} parent=0 // pred_check_branch
    %687 = sbr.rel (0) target = $region45
  $region44: #{better_classifier_forward.1} parent=0 // pred_region
    _
  $region45: #{better_classifier_forward.1} parent=0 // pred_fallthru
    _

</llo_original>
